<compile_context>
chip_gen: v6e
topology: v6e:2x2x1
jax: 0.10.0
libtpu: 0.0.40
codegen_flags: <defaults>
</compile_context>

<pallas_src>
import math

import jax
import jax.numpy as jnp
import numpy as np
from jax import lax
from jax.experimental import pallas as pl
from jax.experimental.pallas import tpu as pltpu


def lstm_kernel(x_ref, wih_ref, bias_ref, whh_ref, wlin_ref, blin_ref, out_ref):
    """Whole-sequence LSTM recurrence + linear head in one invocation.

    x_ref    : (T, B, 1)  raw input sequence (input_size == 1)
    wih_ref  : (1, 4H)    input weights as a row (gate order [i, f, o, g])
    bias_ref : (1, 4H)    fused bias  b_ih + b_hh  (reordered)
    whh_ref  : (H, 4H)    recurrent weights (transposed, reordered)
    wlin_ref : (1, H)     linear head weight row
    blin_ref : (1, 1)     linear head bias (SMEM scalar)
    out_ref  : (B, 1)     final output, written directly (no wrapper slice)
    """
    T, B, _ = x_ref.shape
    G = whh_ref.shape[1]
    H = G // 4

    # Loop-invariant loads, hoisted out of the recurrence.
    whh = whh_ref[...]        # (H, 4H)
    wih = wih_ref[...]        # (1, 4H)
    bias = bias_ref[...]      # (1, 4H)

    h0 = jnp.zeros((B, H), jnp.float32)
    c0 = jnp.zeros((B, H), jnp.float32)

    def step(t, carry):
        h, c = carry
        # Fused input projection (broadcast FMA, input_size == 1) +
        # recurrent projection (MXU).
        gates = (x_ref[t] * wih + bias
                 + jnp.dot(h, whh, preferred_element_type=jnp.float32))
        # [i, f, o, g]: one sigmoid over a contiguous (B, 3H) slab,
        # one tanh over (B, H).
        sig = jax.nn.sigmoid(gates[:, : 3 * H])
        i = sig[:, 0 * H: 1 * H]
        f = sig[:, 1 * H: 2 * H]
        o = sig[:, 2 * H: 3 * H]
        g = jnp.tanh(gates[:, 3 * H:])
        c_new = f * c + i * g
        h_new = o * jnp.tanh(c_new)
        return (h_new, c_new)

    # Bounded unroll: fully unrolled at T=8, fixed code size for longer T.
    h_last, _ = lax.fori_loop(0, T, step, (h0, c0), unroll=min(T, 8))

    # Linear head: VPU multiply + lane reduction (no N=1 MXU matmul).
    y = jnp.sum(h_last * wlin_ref[...], axis=-1, keepdims=True) + blin_ref[0, 0]
    out_ref[...] = y


def prepare_lstm_params(w_ih, w_hh, b_ih, b_hh, w_lin, b_lin):
    """One-time parameter prep (gate reorder / transposes), outside the
    per-call jit so the forward pass is a single kernel launch."""
    H = w_hh.shape[1]
    # Reorder PyTorch gate order [i, f, g, o] -> [i, f, o, g] (static perm).
    perm = np.concatenate([
        np.arange(0, H), np.arange(H, 2 * H),
        np.arange(3 * H, 4 * H), np.arange(2 * H, 3 * H)])
    wih_row = jnp.asarray(w_ih)[perm].reshape(1, 4 * H)       # (1, 4H)
    whh_t = jnp.asarray(w_hh)[perm].T                         # (H, 4H)
    bias_row = (jnp.asarray(b_ih) + jnp.asarray(b_hh))[perm].reshape(1, 4 * H)
    wlin_row = jnp.asarray(w_lin).reshape(1, H)               # (1, H)
    blin = jnp.asarray(b_lin).reshape(1, 1)                   # (1, 1)
    return wih_row, whh_t, bias_row, wlin_row, blin


@jax.jit
def lstm_forward(x, wih_row, whh_t, bias_row, wlin_row, blin):
    """x: (T, B, 1) float32.  Returns (B, 1) float32."""
    T, B, _ = x.shape
    vmem = pl.BlockSpec(memory_space=pltpu.MemorySpace.VMEM)
    smem = pl.BlockSpec(memory_space=pltpu.MemorySpace.SMEM)
    return pl.pallas_call(
        lstm_kernel,
        out_shape=jax.ShapeDtypeStruct((B, 1), jnp.float32),
        in_specs=[vmem, vmem, vmem, vmem, vmem, smem],
        out_specs=vmem,
    )(x, wih_row, bias_row, whh_t, wlin_row, blin)


def lstm_reference(x, w_ih, w_hh, b_ih, b_hh, w_lin, b_lin):
    """Pure-JAX reference mirroring torch.nn.LSTM + Linear forward."""
    T, B, _ = x.shape
    H = w_hh.shape[1]

    def step(carry, x_t):
        h, c = carry
        gates = x_t @ w_ih.T + b_ih + h @ w_hh.T + b_hh
        i = jax.nn.sigmoid(gates[:, 0 * H:1 * H])
        f = jax.nn.sigmoid(gates[:, 1 * H:2 * H])
        g = jnp.tanh(gates[:, 2 * H:3 * H])
        o = jax.nn.sigmoid(gates[:, 3 * H:4 * H])
        c = f * c + i * g
        h = o * jnp.tanh(c)
        return (h, c), h

    init = (jnp.zeros((B, H), jnp.float32), jnp.zeros((B, H), jnp.float32))
    (_, _), hs = jax.lax.scan(step, init, x)
    h_last = hs[-1]
    return h_last @ w_lin.T + b_lin


if __name__ == "__main__":
    T, B, H = 8, 2, 32     # seq_len, batch, hidden_size (input_size = 1)

    key = jax.random.PRNGKey(0)
    kx, k1, k2, k3, k4, k5, k6 = jax.random.split(key, 7)
    bound = 1.0 / math.sqrt(H)
    uni = lambda k, shape: jax.random.uniform(
        k, shape, jnp.float32, minval=-bound, maxval=bound)

    # Parameters (deterministic, PyTorch-shaped)
    w_ih = uni(k1, (4 * H, 1))    # lstm.weight_ih_l0
    w_hh = uni(k2, (4 * H, H))    # lstm.weight_hh_l0
    b_ih = uni(k3, (4 * H,))      # lstm.bias_ih_l0
    b_hh = uni(k4, (4 * H,))      # lstm.bias_hh_l0
    w_lin = uni(k5, (1, H))       # linear.weight
    b_lin = uni(k6, (1,))         # linear.bias

    x = jax.random.normal(kx, (T, B, 1), jnp.float32)

    # One-time parameter prep (outside the per-call path).
    params = prepare_lstm_params(w_ih, w_hh, b_ih, b_hh, w_lin, b_lin)
    params = jax.block_until_ready(params)

    out = lstm_forward(x, *params)
    out = jax.block_until_ready(out)

    ref = lstm_reference(x, w_ih, w_hh, b_ih, b_hh, w_lin, b_lin)
    np.testing.assert_allclose(np.asarray(out), np.asarray(ref),
                               rtol=1e-5, atol=1e-5)
    assert out.shape == (B, 1)
    print("KERNEL_OK")
</pallas_src>

<mosaic_0001>
module attributes {stable_mosaic.version = 11 : i64} {
  func.func @lstm_kernel(%arg0: memref<8x2x1xf32, #tpu.memory_space<vmem>>, %arg1: memref<1x128xf32, #tpu.memory_space<vmem>>, %arg2: memref<1x128xf32, #tpu.memory_space<vmem>>, %arg3: memref<32x128xf32, #tpu.memory_space<vmem>>, %arg4: memref<1x32xf32, #tpu.memory_space<vmem>>, %arg5: memref<1x1xf32, #tpu.memory_space<smem>>, %arg6: memref<2x1xf32, #tpu.memory_space<vmem>>) attributes {dimension_semantics = [], scalar_prefetch = 0 : i64, scratch_operands = 0 : i64, tpu.core_type = #tpu.core_type<tc>} {
    %c0 = arith.constant 0 : index
    %c0_0 = arith.constant 0 : index
    %0 = vector.load %arg3[%c0, %c0_0] : memref<32x128xf32, #tpu.memory_space<vmem>>, vector<32x128xf32>
    %c0_1 = arith.constant 0 : index
    %c0_2 = arith.constant 0 : index
    %1 = vector.load %arg1[%c0_1, %c0_2] : memref<1x128xf32, #tpu.memory_space<vmem>>, vector<1x128xf32>
    %c0_3 = arith.constant 0 : index
    %c0_4 = arith.constant 0 : index
    %2 = vector.load %arg2[%c0_3, %c0_4] : memref<1x128xf32, #tpu.memory_space<vmem>>, vector<1x128xf32>
    %cst = arith.constant 0.000000e+00 : f32
    %3 = vector.broadcast %cst : f32 to vector<2x32xf32>
    %cst_5 = arith.constant 0.000000e+00 : f32
    %4 = vector.broadcast %cst_5 : f32 to vector<2x32xf32>
    %c0_i32 = arith.constant 0 : i32
    %5 = arith.index_cast %c0_i32 : i32 to index
    %c0_6 = arith.constant 0 : index
    %c0_7 = arith.constant 0 : index
    %6 = vector.load %arg0[%5, %c0_6, %c0_7] : memref<8x2x1xf32, #tpu.memory_space<vmem>>, vector<1x2x1xf32>
    %7 = vector.shape_cast %6 : vector<1x2x1xf32> to vector<2x1xf32>
    %8 = vector.broadcast %7 : vector<2x1xf32> to vector<2x128xf32>
    %9 = vector.broadcast %1 : vector<1x128xf32> to vector<2x128xf32>
    %10 = arith.mulf %8, %9 : vector<2x128xf32>
    %11 = vector.broadcast %2 : vector<1x128xf32> to vector<2x128xf32>
    %12 = arith.addf %10, %11 : vector<2x128xf32>
    %cst_8 = arith.constant dense<0.000000e+00> : vector<2x128xf32>
    %13 = tpu.matmul %3, %0, %cst_8 {dimension_numbers = #tpu.dot_dimension_numbers<[1], [0], [0], [1], [0, 0, 1, 1], [], []>} : vector<2x32xf32>, vector<32x128xf32>, vector<2x128xf32> -> vector<2x128xf32>
    %14 = arith.addf %12, %13 : vector<2x128xf32>
    %15 = vector.extract_strided_slice %14 {offsets = [0, 0], sizes = [2, 96], strides = [1, 1]} : vector<2x128xf32> to vector<2x96xf32>
    %16 = arith.negf %15 : vector<2x96xf32>
    %17 = math.exp %16 : vector<2x96xf32>
    %cst_9 = arith.constant 1.000000e+00 : f32
    %18 = vector.broadcast %cst_9 : f32 to vector<2x96xf32>
    %19 = arith.addf %18, %17 : vector<2x96xf32>
    %20 = arith.divf %18, %19 : vector<2x96xf32>
    %21 = vector.extract_strided_slice %20 {offsets = [0, 0], sizes = [2, 32], strides = [1, 1]} : vector<2x96xf32> to vector<2x32xf32>
    %22 = vector.extract_strided_slice %20 {offsets = [0, 32], sizes = [2, 32], strides = [1, 1]} : vector<2x96xf32> to vector<2x32xf32>
    %23 = vector.extract_strided_slice %20 {offsets = [0, 64], sizes = [2, 32], strides = [1, 1]} : vector<2x96xf32> to vector<2x32xf32>
    %24 = vector.extract_strided_slice %14 {offsets = [0, 96], sizes = [2, 32], strides = [1, 1]} : vector<2x128xf32> to vector<2x32xf32>
    %25 = math.tanh %24 : vector<2x32xf32>
    %26 = arith.mulf %22, %4 : vector<2x32xf32>
    %27 = arith.mulf %21, %25 : vector<2x32xf32>
    %28 = arith.addf %26, %27 : vector<2x32xf32>
    %29 = math.tanh %28 : vector<2x32xf32>
    %30 = arith.mulf %23, %29 : vector<2x32xf32>
    %c1_i32 = arith.constant 1 : i32
    %31 = arith.index_cast %c1_i32 : i32 to index
    %c0_10 = arith.constant 0 : index
    %c0_11 = arith.constant 0 : index
    %32 = vector.load %arg0[%31, %c0_10, %c0_11] : memref<8x2x1xf32, #tpu.memory_space<vmem>>, vector<1x2x1xf32>
    %33 = vector.shape_cast %32 : vector<1x2x1xf32> to vector<2x1xf32>
    %34 = vector.broadcast %33 : vector<2x1xf32> to vector<2x128xf32>
    %35 = vector.broadcast %1 : vector<1x128xf32> to vector<2x128xf32>
    %36 = arith.mulf %34, %35 : vector<2x128xf32>
    %37 = vector.broadcast %2 : vector<1x128xf32> to vector<2x128xf32>
    %38 = arith.addf %36, %37 : vector<2x128xf32>
    %cst_12 = arith.constant dense<0.000000e+00> : vector<2x128xf32>
    %39 = tpu.matmul %30, %0, %cst_12 {dimension_numbers = #tpu.dot_dimension_numbers<[1], [0], [0], [1], [0, 0, 1, 1], [], []>} : vector<2x32xf32>, vector<32x128xf32>, vector<2x128xf32> -> vector<2x128xf32>
    %40 = arith.addf %38, %39 : vector<2x128xf32>
    %41 = vector.extract_strided_slice %40 {offsets = [0, 0], sizes = [2, 96], strides = [1, 1]} : vector<2x128xf32> to vector<2x96xf32>
    %42 = arith.negf %41 : vector<2x96xf32>
    %43 = math.exp %42 : vector<2x96xf32>
    %cst_13 = arith.constant 1.000000e+00 : f32
    %44 = vector.broadcast %cst_13 : f32 to vector<2x96xf32>
    %45 = arith.addf %44, %43 : vector<2x96xf32>
    %46 = arith.divf %44, %45 : vector<2x96xf32>
    %47 = vector.extract_strided_slice %46 {offsets = [0, 0], sizes = [2, 32], strides = [1, 1]} : vector<2x96xf32> to vector<2x32xf32>
    %48 = vector.extract_strided_slice %46 {offsets = [0, 32], sizes = [2, 32], strides = [1, 1]} : vector<2x96xf32> to vector<2x32xf32>
    %49 = vector.extract_strided_slice %46 {offsets = [0, 64], sizes = [2, 32], strides = [1, 1]} : vector<2x96xf32> to vector<2x32xf32>
    %50 = vector.extract_strided_slice %40 {offsets = [0, 96], sizes = [2, 32], strides = [1, 1]} : vector<2x128xf32> to vector<2x32xf32>
    %51 = math.tanh %50 : vector<2x32xf32>
    %52 = arith.mulf %48, %28 : vector<2x32xf32>
    %53 = arith.mulf %47, %51 : vector<2x32xf32>
    %54 = arith.addf %52, %53 : vector<2x32xf32>
    %55 = math.tanh %54 : vector<2x32xf32>
    %56 = arith.mulf %49, %55 : vector<2x32xf32>
    %c2_i32 = arith.constant 2 : i32
    %57 = arith.index_cast %c2_i32 : i32 to index
    %c0_14 = arith.constant 0 : index
    %c0_15 = arith.constant 0 : index
    %58 = vector.load %arg0[%57, %c0_14, %c0_15] : memref<8x2x1xf32, #tpu.memory_space<vmem>>, vector<1x2x1xf32>
    %59 = vector.shape_cast %58 : vector<1x2x1xf32> to vector<2x1xf32>
    %60 = vector.broadcast %59 : vector<2x1xf32> to vector<2x128xf32>
    %61 = vector.broadcast %1 : vector<1x128xf32> to vector<2x128xf32>
    %62 = arith.mulf %60, %61 : vector<2x128xf32>
    %63 = vector.broadcast %2 : vector<1x128xf32> to vector<2x128xf32>
    %64 = arith.addf %62, %63 : vector<2x128xf32>
    %cst_16 = arith.constant dense<0.000000e+00> : vector<2x128xf32>
    %65 = tpu.matmul %56, %0, %cst_16 {dimension_numbers = #tpu.dot_dimension_numbers<[1], [0], [0], [1], [0, 0, 1, 1], [], []>} : vector<2x32xf32>, vector<32x128xf32>, vector<2x128xf32> -> vector<2x128xf32>
    %66 = arith.addf %64, %65 : vector<2x128xf32>
    %67 = vector.extract_strided_slice %66 {offsets = [0, 0], sizes = [2, 96], strides = [1, 1]} : vector<2x128xf32> to vector<2x96xf32>
    %68 = arith.negf %67 : vector<2x96xf32>
    %69 = math.exp %68 : vector<2x96xf32>
    %cst_17 = arith.constant 1.000000e+00 : f32
    %70 = vector.broadcast %cst_17 : f32 to vector<2x96xf32>
    %71 = arith.addf %70, %69 : vector<2x96xf32>
    %72 = arith.divf %70, %71 : vector<2x96xf32>
    %73 = vector.extract_strided_slice %72 {offsets = [0, 0], sizes = [2, 32], strides = [1, 1]} : vector<2x96xf32> to vector<2x32xf32>
    %74 = vector.extract_strided_slice %72 {offsets = [0, 32], sizes = [2, 32], strides = [1, 1]} : vector<2x96xf32> to vector<2x32xf32>
    %75 = vector.extract_strided_slice %72 {offsets = [0, 64], sizes = [2, 32], strides = [1, 1]} : vector<2x96xf32> to vector<2x32xf32>
    %76 = vector.extract_strided_slice %66 {offsets = [0, 96], sizes = [2, 32], strides = [1, 1]} : vector<2x128xf32> to vector<2x32xf32>
    %77 = math.tanh %76 : vector<2x32xf32>
    %78 = arith.mulf %74, %54 : vector<2x32xf32>
    %79 = arith.mulf %73, %77 : vector<2x32xf32>
    %80 = arith.addf %78, %79 : vector<2x32xf32>
    %81 = math.tanh %80 : vector<2x32xf32>
    %82 = arith.mulf %75, %81 : vector<2x32xf32>
    %c3_i32 = arith.constant 3 : i32
    %83 = arith.index_cast %c3_i32 : i32 to index
    %c0_18 = arith.constant 0 : index
    %c0_19 = arith.constant 0 : index
    %84 = vector.load %arg0[%83, %c0_18, %c0_19] : memref<8x2x1xf32, #tpu.memory_space<vmem>>, vector<1x2x1xf32>
    %85 = vector.shape_cast %84 : vector<1x2x1xf32> to vector<2x1xf32>
    %86 = vector.broadcast %85 : vector<2x1xf32> to vector<2x128xf32>
    %87 = vector.broadcast %1 : vector<1x128xf32> to vector<2x128xf32>
    %88 = arith.mulf %86, %87 : vector<2x128xf32>
    %89 = vector.broadcast %2 : vector<1x128xf32> to vector<2x128xf32>
    %90 = arith.addf %88, %89 : vector<2x128xf32>
    %cst_20 = arith.constant dense<0.000000e+00> : vector<2x128xf32>
    %91 = tpu.matmul %82, %0, %cst_20 {dimension_numbers = #tpu.dot_dimension_numbers<[1], [0], [0], [1], [0, 0, 1, 1], [], []>} : vector<2x32xf32>, vector<32x128xf32>, vector<2x128xf32> -> vector<2x128xf32>
    %92 = arith.addf %90, %91 : vector<2x128xf32>
    %93 = vector.extract_strided_slice %92 {offsets = [0, 0], sizes = [2, 96], strides = [1, 1]} : vector<2x128xf32> to vector<2x96xf32>
    %94 = arith.negf %93 : vector<2x96xf32>
    %95 = math.exp %94 : vector<2x96xf32>
    %cst_21 = arith.constant 1.000000e+00 : f32
    %96 = vector.broadcast %cst_21 : f32 to vector<2x96xf32>
    %97 = arith.addf %96, %95 : vector<2x96xf32>
    %98 = arith.divf %96, %97 : vector<2x96xf32>
    %99 = vector.extract_strided_slice %98 {offsets = [0, 0], sizes = [2, 32], strides = [1, 1]} : vector<2x96xf32> to vector<2x32xf32>
    %100 = vector.extract_strided_slice %98 {offsets = [0, 32], sizes = [2, 32], strides = [1, 1]} : vector<2x96xf32> to vector<2x32xf32>
    %101 = vector.extract_strided_slice %98 {offsets = [0, 64], sizes = [2, 32], strides = [1, 1]} : vector<2x96xf32> to vector<2x32xf32>
    %102 = vector.extract_strided_slice %92 {offsets = [0, 96], sizes = [2, 32], strides = [1, 1]} : vector<2x128xf32> to vector<2x32xf32>
    %103 = math.tanh %102 : vector<2x32xf32>
    %104 = arith.mulf %100, %80 : vector<2x32xf32>
    %105 = arith.mulf %99, %103 : vector<2x32xf32>
    %106 = arith.addf %104, %105 : vector<2x32xf32>
    %107 = math.tanh %106 : vector<2x32xf32>
    %108 = arith.mulf %101, %107 : vector<2x32xf32>
    %c4_i32 = arith.constant 4 : i32
    %109 = arith.index_cast %c4_i32 : i32 to index
    %c0_22 = arith.constant 0 : index
    %c0_23 = arith.constant 0 : index
    %110 = vector.load %arg0[%109, %c0_22, %c0_23] : memref<8x2x1xf32, #tpu.memory_space<vmem>>, vector<1x2x1xf32>
    %111 = vector.shape_cast %110 : vector<1x2x1xf32> to vector<2x1xf32>
    %112 = vector.broadcast %111 : vector<2x1xf32> to vector<2x128xf32>
    %113 = vector.broadcast %1 : vector<1x128xf32> to vector<2x128xf32>
    %114 = arith.mulf %112, %113 : vector<2x128xf32>
    %115 = vector.broadcast %2 : vector<1x128xf32> to vector<2x128xf32>
    %116 = arith.addf %114, %115 : vector<2x128xf32>
    %cst_24 = arith.constant dense<0.000000e+00> : vector<2x128xf32>
    %117 = tpu.matmul %108, %0, %cst_24 {dimension_numbers = #tpu.dot_dimension_numbers<[1], [0], [0], [1], [0, 0, 1, 1], [], []>} : vector<2x32xf32>, vector<32x128xf32>, vector<2x128xf32> -> vector<2x128xf32>
    %118 = arith.addf %116, %117 : vector<2x128xf32>
    %119 = vector.extract_strided_slice %118 {offsets = [0, 0], sizes = [2, 96], strides = [1, 1]} : vector<2x128xf32> to vector<2x96xf32>
    %120 = arith.negf %119 : vector<2x96xf32>
    %121 = math.exp %120 : vector<2x96xf32>
    %cst_25 = arith.constant 1.000000e+00 : f32
    %122 = vector.broadcast %cst_25 : f32 to vector<2x96xf32>
    %123 = arith.addf %122, %121 : vector<2x96xf32>
    %124 = arith.divf %122, %123 : vector<2x96xf32>
    %125 = vector.extract_strided_slice %124 {offsets = [0, 0], sizes = [2, 32], strides = [1, 1]} : vector<2x96xf32> to vector<2x32xf32>
    %126 = vector.extract_strided_slice %124 {offsets = [0, 32], sizes = [2, 32], strides = [1, 1]} : vector<2x96xf32> to vector<2x32xf32>
    %127 = vector.extract_strided_slice %124 {offsets = [0, 64], sizes = [2, 32], strides = [1, 1]} : vector<2x96xf32> to vector<2x32xf32>
    %128 = vector.extract_strided_slice %118 {offsets = [0, 96], sizes = [2, 32], strides = [1, 1]} : vector<2x128xf32> to vector<2x32xf32>
    %129 = math.tanh %128 : vector<2x32xf32>
    %130 = arith.mulf %126, %106 : vector<2x32xf32>
    %131 = arith.mulf %125, %129 : vector<2x32xf32>
    %132 = arith.addf %130, %131 : vector<2x32xf32>
    %133 = math.tanh %132 : vector<2x32xf32>
    %134 = arith.mulf %127, %133 : vector<2x32xf32>
    %c5_i32 = arith.constant 5 : i32
    %135 = arith.index_cast %c5_i32 : i32 to index
    %c0_26 = arith.constant 0 : index
    %c0_27 = arith.constant 0 : index
    %136 = vector.load %arg0[%135, %c0_26, %c0_27] : memref<8x2x1xf32, #tpu.memory_space<vmem>>, vector<1x2x1xf32>
    %137 = vector.shape_cast %136 : vector<1x2x1xf32> to vector<2x1xf32>
    %138 = vector.broadcast %137 : vector<2x1xf32> to vector<2x128xf32>
    %139 = vector.broadcast %1 : vector<1x128xf32> to vector<2x128xf32>
    %140 = arith.mulf %138, %139 : vector<2x128xf32>
    %141 = vector.broadcast %2 : vector<1x128xf32> to vector<2x128xf32>
    %142 = arith.addf %140, %141 : vector<2x128xf32>
    %cst_28 = arith.constant dense<0.000000e+00> : vector<2x128xf32>
    %143 = tpu.matmul %134, %0, %cst_28 {dimension_numbers = #tpu.dot_dimension_numbers<[1], [0], [0], [1], [0, 0, 1, 1], [], []>} : vector<2x32xf32>, vector<32x128xf32>, vector<2x128xf32> -> vector<2x128xf32>
    %144 = arith.addf %142, %143 : vector<2x128xf32>
    %145 = vector.extract_strided_slice %144 {offsets = [0, 0], sizes = [2, 96], strides = [1, 1]} : vector<2x128xf32> to vector<2x96xf32>
    %146 = arith.negf %145 : vector<2x96xf32>
    %147 = math.exp %146 : vector<2x96xf32>
    %cst_29 = arith.constant 1.000000e+00 : f32
    %148 = vector.broadcast %cst_29 : f32 to vector<2x96xf32>
    %149 = arith.addf %148, %147 : vector<2x96xf32>
    %150 = arith.divf %148, %149 : vector<2x96xf32>
    %151 = vector.extract_strided_slice %150 {offsets = [0, 0], sizes = [2, 32], strides = [1, 1]} : vector<2x96xf32> to vector<2x32xf32>
    %152 = vector.extract_strided_slice %150 {offsets = [0, 32], sizes = [2, 32], strides = [1, 1]} : vector<2x96xf32> to vector<2x32xf32>
    %153 = vector.extract_strided_slice %150 {offsets = [0, 64], sizes = [2, 32], strides = [1, 1]} : vector<2x96xf32> to vector<2x32xf32>
    %154 = vector.extract_strided_slice %144 {offsets = [0, 96], sizes = [2, 32], strides = [1, 1]} : vector<2x128xf32> to vector<2x32xf32>
    %155 = math.tanh %154 : vector<2x32xf32>
    %156 = arith.mulf %152, %132 : vector<2x32xf32>
    %157 = arith.mulf %151, %155 : vector<2x32xf32>
    %158 = arith.addf %156, %157 : vector<2x32xf32>
    %159 = math.tanh %158 : vector<2x32xf32>
    %160 = arith.mulf %153, %159 : vector<2x32xf32>
    %c6_i32 = arith.constant 6 : i32
    %161 = arith.index_cast %c6_i32 : i32 to index
    %c0_30 = arith.constant 0 : index
    %c0_31 = arith.constant 0 : index
    %162 = vector.load %arg0[%161, %c0_30, %c0_31] : memref<8x2x1xf32, #tpu.memory_space<vmem>>, vector<1x2x1xf32>
    %163 = vector.shape_cast %162 : vector<1x2x1xf32> to vector<2x1xf32>
    %164 = vector.broadcast %163 : vector<2x1xf32> to vector<2x128xf32>
    %165 = vector.broadcast %1 : vector<1x128xf32> to vector<2x128xf32>
    %166 = arith.mulf %164, %165 : vector<2x128xf32>
    %167 = vector.broadcast %2 : vector<1x128xf32> to vector<2x128xf32>
    %168 = arith.addf %166, %167 : vector<2x128xf32>
    %cst_32 = arith.constant dense<0.000000e+00> : vector<2x128xf32>
    %169 = tpu.matmul %160, %0, %cst_32 {dimension_numbers = #tpu.dot_dimension_numbers<[1], [0], [0], [1], [0, 0, 1, 1], [], []>} : vector<2x32xf32>, vector<32x128xf32>, vector<2x128xf32> -> vector<2x128xf32>
    %170 = arith.addf %168, %169 : vector<2x128xf32>
    %171 = vector.extract_strided_slice %170 {offsets = [0, 0], sizes = [2, 96], strides = [1, 1]} : vector<2x128xf32> to vector<2x96xf32>
    %172 = arith.negf %171 : vector<2x96xf32>
    %173 = math.exp %172 : vector<2x96xf32>
    %cst_33 = arith.constant 1.000000e+00 : f32
    %174 = vector.broadcast %cst_33 : f32 to vector<2x96xf32>
    %175 = arith.addf %174, %173 : vector<2x96xf32>
    %176 = arith.divf %174, %175 : vector<2x96xf32>
    %177 = vector.extract_strided_slice %176 {offsets = [0, 0], sizes = [2, 32], strides = [1, 1]} : vector<2x96xf32> to vector<2x32xf32>
    %178 = vector.extract_strided_slice %176 {offsets = [0, 32], sizes = [2, 32], strides = [1, 1]} : vector<2x96xf32> to vector<2x32xf32>
    %179 = vector.extract_strided_slice %176 {offsets = [0, 64], sizes = [2, 32], strides = [1, 1]} : vector<2x96xf32> to vector<2x32xf32>
    %180 = vector.extract_strided_slice %170 {offsets = [0, 96], sizes = [2, 32], strides = [1, 1]} : vector<2x128xf32> to vector<2x32xf32>
    %181 = math.tanh %180 : vector<2x32xf32>
    %182 = arith.mulf %178, %158 : vector<2x32xf32>
    %183 = arith.mulf %177, %181 : vector<2x32xf32>
    %184 = arith.addf %182, %183 : vector<2x32xf32>
    %185 = math.tanh %184 : vector<2x32xf32>
    %186 = arith.mulf %179, %185 : vector<2x32xf32>
    %c7_i32 = arith.constant 7 : i32
    %187 = arith.index_cast %c7_i32 : i32 to index
    %c0_34 = arith.constant 0 : index
    %c0_35 = arith.constant 0 : index
    %188 = vector.load %arg0[%187, %c0_34, %c0_35] : memref<8x2x1xf32, #tpu.memory_space<vmem>>, vector<1x2x1xf32>
    %189 = vector.shape_cast %188 : vector<1x2x1xf32> to vector<2x1xf32>
    %190 = vector.broadcast %189 : vector<2x1xf32> to vector<2x128xf32>
    %191 = vector.broadcast %1 : vector<1x128xf32> to vector<2x128xf32>
    %192 = arith.mulf %190, %191 : vector<2x128xf32>
    %193 = vector.broadcast %2 : vector<1x128xf32> to vector<2x128xf32>
    %194 = arith.addf %192, %193 : vector<2x128xf32>
    %cst_36 = arith.constant dense<0.000000e+00> : vector<2x128xf32>
    %195 = tpu.matmul %186, %0, %cst_36 {dimension_numbers = #tpu.dot_dimension_numbers<[1], [0], [0], [1], [0, 0, 1, 1], [], []>} : vector<2x32xf32>, vector<32x128xf32>, vector<2x128xf32> -> vector<2x128xf32>
    %196 = arith.addf %194, %195 : vector<2x128xf32>
    %197 = vector.extract_strided_slice %196 {offsets = [0, 0], sizes = [2, 96], strides = [1, 1]} : vector<2x128xf32> to vector<2x96xf32>
    %198 = arith.negf %197 : vector<2x96xf32>
    %199 = math.exp %198 : vector<2x96xf32>
    %cst_37 = arith.constant 1.000000e+00 : f32
    %200 = vector.broadcast %cst_37 : f32 to vector<2x96xf32>
    %201 = arith.addf %200, %199 : vector<2x96xf32>
    %202 = arith.divf %200, %201 : vector<2x96xf32>
    %203 = vector.extract_strided_slice %202 {offsets = [0, 0], sizes = [2, 32], strides = [1, 1]} : vector<2x96xf32> to vector<2x32xf32>
    %204 = vector.extract_strided_slice %202 {offsets = [0, 32], sizes = [2, 32], strides = [1, 1]} : vector<2x96xf32> to vector<2x32xf32>
    %205 = vector.extract_strided_slice %202 {offsets = [0, 64], sizes = [2, 32], strides = [1, 1]} : vector<2x96xf32> to vector<2x32xf32>
    %206 = vector.extract_strided_slice %196 {offsets = [0, 96], sizes = [2, 32], strides = [1, 1]} : vector<2x128xf32> to vector<2x32xf32>
    %207 = math.tanh %206 : vector<2x32xf32>
    %208 = arith.mulf %204, %184 : vector<2x32xf32>
    %209 = arith.mulf %203, %207 : vector<2x32xf32>
    %210 = arith.addf %208, %209 : vector<2x32xf32>
    %211 = math.tanh %210 : vector<2x32xf32>
    %212 = arith.mulf %205, %211 : vector<2x32xf32>
    %c8_i32 = arith.constant 8 : i32
    %c0_38 = arith.constant 0 : index
    %c0_39 = arith.constant 0 : index
    %213 = vector.load %arg4[%c0_38, %c0_39] : memref<1x32xf32, #tpu.memory_space<vmem>>, vector<1x32xf32>
    %214 = vector.broadcast %213 : vector<1x32xf32> to vector<2x32xf32>
    %215 = arith.mulf %212, %214 : vector<2x32xf32>
    %cst_40 = arith.constant dense<0.000000e+00> : vector<2xf32>
    %216 = vector.multi_reduction <add>, %215, %cst_40 [1] : vector<2x32xf32> to vector<2xf32>
    %217 = vector.shape_cast %216 : vector<2xf32> to vector<2x1xf32>
    %c0_41 = arith.constant 0 : index
    %c0_42 = arith.constant 0 : index
    %218 = memref.load %arg5[%c0_41, %c0_42] : memref<1x1xf32, #tpu.memory_space<smem>>
    %219 = vector.broadcast %218 : f32 to vector<2x1xf32>
    %220 = arith.addf %217, %219 : vector<2x1xf32>
    %c0_43 = arith.constant 0 : index
    %c0_44 = arith.constant 0 : index
    %221 = vector.load %arg6[%c0_43, %c0_44] : memref<2x1xf32, #tpu.memory_space<vmem>>, vector<2x1xf32>
    tpu.vector_store %arg6[%c0_43, %c0_44], %220 {strides = array<i32>} : memref<2x1xf32, #tpu.memory_space<vmem>>, vector<2x1xf32>,
    return
  }
}

</mosaic_0001>

<llo_original>
// kernel: lstm_forward.1
$region0: #{lstm_forward.1}
  #allocation0 [shape = 'u32[]', space=smem, size = 0x4, offset = 0x4, fixed_abs, tag = 'smem constant byte address 0x4 - core index']
  #allocation1 [shape = 'u32[144,128]{1,0:T(1,128)}', space=vmem, size = 0x12000, scoped, tag = 'internal scratch']
  #allocation2 [shape = 'f32[1,1]{1,0:T(1,128)S(6)}', space=smem, size = 0x200, scoped, tag = 'scoped memory for lstm_forward.1']
  %s0 = inlined_call_operand.vmem [shape: f32[8,2,1], index: 0, kind: input, shape index: {}]
  %s1 = inlined_call_operand.vmem [shape: f32[1,128], index: 1, kind: input, shape index: {}]
  %s2 = inlined_call_operand.vmem [shape: f32[1,128], index: 2, kind: input, shape index: {}]
  %s3 = inlined_call_operand.hbm [shape: f32[32,128], index: 3, kind: input, shape index: {}]
  %s4 = inlined_call_operand.vmem [shape: f32[1,32], index: 4, kind: input, shape index: {}]
  %s5 = inlined_call_operand.<no memory space> [shape: f32[1,1], index: 5, kind: input, shape index: {}]
  %s6 = inlined_call_operand.vmem [shape: f32[2,1], index: 6, kind: output, shape index: {}]
  %s7 = sld [smem:[#allocation0]]
  $region38: #{lstm_forward.1} parent=0
    _
  %s9 = ssub.s32 1, %s7
  %s10 = scalar_select 0, %s9, %s7
  %11 = sst [smem:[#allocation2]] %s5
  $region1: #{lstm_forward.1} parent=0
    #allocation3 [shape = 'u8[16384]{0}', space=vmem, size = 0x4000, scoped, tag = 'input window, operand 3, single buffered']
    #allocation4 [shape = 's32[1]{0}', space=sflag, size = 0x4, scoped, tag = 'scoped memory for lstm_forward.1']
    %12 = vsyncpa [#allocation4], 0
    // Predicated region
    $region2: #{lstm_forward.1} parent=1 // pred_check
      _
    $region3: #{lstm_forward.1} parent=1 // pred_check_branch
      %14 = sbr.rel (0) target = $region5
    $region4: #{lstm_forward.1} parent=1 // pred_region
      _
    $region5: #{lstm_forward.1} parent=1 // pred_fallthru
      _
    // Predicated region
    $region6: #{lstm_forward.1} parent=1 // pred_check
      _
    $region7: #{lstm_forward.1} parent=1 // pred_check_branch
      %16 = sbr.rel (0) target = $region9
    $region8: #{lstm_forward.1} parent=1 // pred_region
      _
    $region9: #{lstm_forward.1} parent=1 // pred_fallthru
      _
    // Predicated region
    $region10: #{lstm_forward.1} parent=1 // pred_check
      _
    $region11: #{lstm_forward.1} parent=1 // pred_check_branch
      %18 = sbr.rel (0) target = $region13
    $region12: #{lstm_forward.1} parent=1 // pred_region
      _
    $region13: #{lstm_forward.1} parent=1 // pred_fallthru
      _
    // Predicated region
    $region14: #{lstm_forward.1} parent=1 // pred_check
      _
    $region15: #{lstm_forward.1} parent=1 // pred_check_branch
      %20 = sbr.rel (0) target = $region17
    $region16: #{lstm_forward.1} parent=1 // pred_region
      %s22 = ssub.s32 512, 512
      %23 = vsyncadd [#allocation4], %s22
      %s24 = sshll.u32 [#allocation3], 4
      %s25 = int_to_ptr.vmem [resolvable:$true] %s24
      %30 = dma.hbm_to_vmem [thread:$0]  %s3, 512, %s25, [#allocation4], 128, 128, 8
    $region17: #{lstm_forward.1} parent=1 // pred_fallthru
      _
    // Predicated region
    $region18: #{lstm_forward.1} parent=1 // pred_check
      _
    $region19: #{lstm_forward.1} parent=1 // pred_check_branch
      %32 = sbr.rel (0) target = $region21
    $region20: #{lstm_forward.1} parent=1 // pred_region
      _
    $region21: #{lstm_forward.1} parent=1 // pred_fallthru
      _
    // Predicated region
    $region22: #{lstm_forward.1} parent=1 // pred_check
      _
    $region23: #{lstm_forward.1} parent=1 // pred_check_branch
      %34 = sbr.rel (0) target = $region25
    $region24: #{lstm_forward.1} parent=1 // pred_region
      _
    $region25: #{lstm_forward.1} parent=1 // pred_fallthru
      _
    // Predicated region
    $region26: #{lstm_forward.1} parent=1 // pred_check
      _
    $region27: #{lstm_forward.1} parent=1 // pred_check_branch
      %36 = sbr.rel (0) target = $region29
    $region28: #{lstm_forward.1} parent=1 // pred_region
      %37 = dma.done [#allocation4], 512
    $region29: #{lstm_forward.1} parent=1 // pred_fallthru
      _
    %v38 = vld [vmem:[#allocation3] sm:$0xff]
    %v39 = vld [vmem:[#allocation3 + $0x8] sm:$0xff]
    %v40 = vld [vmem:[#allocation3 + $0x10] sm:$0xff]
    %v41 = vld [vmem:[#allocation3 + $0x18] sm:$0xff]
    %v42 = vld [vmem:[%s1] sm:$0x1]
    %v43 = vld [vmem:[%s2] sm:$0x1]
    %v44 = vld [vmem:[%s0] sm:$0x3]
    %46 = vset.pattern.permute.xlu0 0
    %47 = vperm.xlu0 %46, %v44
    %v48 = vpop.permute.xlu0 %47
    %v51 = vlaneseq
    %v52 = vshrl.u32 %v51, 7
    %v53 = vsub.s32 0, %v52
    %v54 = vrot.slane %v42, %v53
    %v56 = vmul.f32 %v48, %v54
    %v58 = vlaneseq
    %v59 = vshrl.u32 %v58, 7
    %v60 = vsub.s32 0, %v59
    %v61 = vrot.slane %v43, %v60
    %v63 = vadd.f32 %v56, %v61
    %vm64 = vcmask 261120
    %v66 = vsel %vm64, 0.0, 0
    %68 = vmatprep.subr.mxu0 0.0
    %69 = vmatpush1.msra.mxu0 0.0
    %70 = vmatprep.subr.mxu0 0.0
    %71 = vmatpush1.msra.mxu0 0.0
    %72 = vmatprep.subr.mxu0 0.0
    %73 = vmatpush1.msra.mxu0 0.0
    %74 = vmatprep.subr.mxu0 0.0
    %75 = vmatpush1.msra.mxu0 0.0
    %76 = vmatprep.subr.mxu0 0.0
    %77 = vmatpush1.msra.mxu0 0.0
    %78 = vmatprep.subr.mxu0 0.0
    %79 = vmatpush1.msra.mxu0 0.0
    %80 = vmatprep.subr.mxu0 0.0
    %81 = vmatpush1.msra.mxu0 0.0
    %82 = vmatprep.subr.mxu0 0.0
    %83 = vmatpush1.msra.mxu0 0.0
    %84 = vmatprep.subr.mxu0 0.0
    %85 = vmatpush1.msra.mxu0 0.0
    %86 = vmatprep.subr.mxu0 0.0
    %87 = vmatpush1.msra.mxu0 0.0
    %88 = vmatprep.subr.mxu0 0.0
    %89 = vmatpush1.msra.mxu0 0.0
    %90 = vmatprep.subr.mxu0 0.0
    %91 = vmatpush1.msra.mxu0 0.0
    %92 = vmatprep.subr.mxu0 0.0
    %93 = vmatpush1.msra.mxu0 %v41
    %94 = vmatprep.subr.mxu0 0.0
    %95 = vmatpush1.msra.mxu0 %v40
    %96 = vmatprep.subr.mxu0 0.0
    %97 = vmatpush1.msra.mxu0 %v39
    %98 = vmatprep.subr.mxu0 0.0
    %99 = vmatpush1.msra.mxu0 %v38
    %100 = vmatprep.subr.mxu0 0.0
    %101 = vmatpush2.msra.mxu0 0.0
    %102 = vmatprep.subr.mxu0 0.0
    %103 = vmatpush2.msra.mxu0 0.0
    %104 = vmatprep.subr.mxu0 0.0
    %105 = vmatpush2.msra.mxu0 0.0
    %106 = vmatprep.subr.mxu0 0.0
    %107 = vmatpush2.msra.mxu0 0.0
    %108 = vmatprep.subr.mxu0 0.0
    %109 = vmatpush2.msra.mxu0 0.0
    %110 = vmatprep.subr.mxu0 0.0
    %111 = vmatpush2.msra.mxu0 0.0
    %112 = vmatprep.subr.mxu0 0.0
    %113 = vmatpush2.msra.mxu0 0.0
    %114 = vmatprep.subr.mxu0 0.0
    %115 = vmatpush2.msra.mxu0 0.0
    %116 = vmatprep.subr.mxu0 0.0
    %117 = vmatpush2.msra.mxu0 0.0
    %118 = vmatprep.subr.mxu0 0.0
    %119 = vmatpush2.msra.mxu0 0.0
    %120 = vmatprep.subr.mxu0 0.0
    %121 = vmatpush2.msra.mxu0 0.0
    %122 = vmatprep.subr.mxu0 0.0
    %123 = vmatpush2.msra.mxu0 0.0
    %124 = vmatprep.subr.mxu0 0.0
    %125 = vmatpush2.msra.mxu0 0.0
    %126 = vmatprep.subr.mxu0 0.0
    %127 = vmatpush2.msra.mxu0 0.0
    %128 = vmatprep.subr.mxu0 0.0
    %129 = vmatpush2.msra.mxu0 0.0
    %130 = vmatprep.subr.mxu0 0.0
    %131 = vmatpush2.msra.mxu0 0.0
    %132 = vmatprep.mubr.f32.mxu0 0.0
    %133 = vmatmul.mubr.f32.gmra.mxu0 %v66
    %v134 = vpop.f32.mrf.mxu0
    %v135 = vadd.f32 0.0, %v134
    %v136 = vpop.f32.mrf.mxu0
    %137 = vdwg.mxu0
    %v138 = vadd.f32 %v63, %v135
    %v139 = vxor.u32 %v138, 2147483648
    %v140 = vmul.f32 %v139, 1.442695
    %v141 = vpow.pop %v140
    %v142 = vadd.f32 %v141, 1.0
    %v143 = vrcp.pop %v142
    %v144 = vmul.f32 1.0, %v143
    %v145 = vtanh.pop %v138
    %v146 = vmul.f32 %v144, 0.0
    %148 = vrot.lane.b32.xlu0 %v145, 32
    %v149 = vpop.permute.xlu0 %148
    %v151 = vmul.f32 %v144, %v149
    %153 = vrot.lane.b32.xlu0 %v151, 32
    %v154 = vpop.permute.xlu0 %153
    %v156 = vadd.f32 %v146, %v154
    %v157 = vtanh.pop %v156
    %159 = vrot.lane.b32.xlu0 %v157, 32
    %v160 = vpop.permute.xlu0 %159
    %v162 = vmul.f32 %v144, %v160
    %s163 = scalar_lea.vmem %s0, 2
    %v164 = vld [vmem:[%s163] sm:$0x3]
    %166 = vset.pattern.permute.xlu0 0
    %167 = vperm.xlu0 %166, %v164
    %v168 = vpop.permute.xlu0 %167
    %v170 = vmul.f32 %v168, %v54
    %v171 = vadd.f32 %v170, %v61
    %173 = vrot.lane.b32.xlu0 %v162, 64
    %v174 = vpop.permute.xlu0 %173
    %v175 = vsel %vm64, %v174, 0
    %177 = vmatprep.subr.mxu0 0.0
    %178 = vmatpush1.msra.mxu0 0.0
    %179 = vmatprep.subr.mxu0 0.0
    %180 = vmatpush1.msra.mxu0 0.0
    %181 = vmatprep.subr.mxu0 0.0
    %182 = vmatpush1.msra.mxu0 0.0
    %183 = vmatprep.subr.mxu0 0.0
    %184 = vmatpush1.msra.mxu0 0.0
    %185 = vmatprep.subr.mxu0 0.0
    %186 = vmatpush1.msra.mxu0 0.0
    %187 = vmatprep.subr.mxu0 0.0
    %188 = vmatpush1.msra.mxu0 0.0
    %189 = vmatprep.subr.mxu0 0.0
    %190 = vmatpush1.msra.mxu0 0.0
    %191 = vmatprep.subr.mxu0 0.0
    %192 = vmatpush1.msra.mxu0 0.0
    %193 = vmatprep.subr.mxu0 0.0
    %194 = vmatpush1.msra.mxu0 0.0
    %195 = vmatprep.subr.mxu0 0.0
    %196 = vmatpush1.msra.mxu0 0.0
    %197 = vmatprep.subr.mxu0 0.0
    %198 = vmatpush1.msra.mxu0 0.0
    %199 = vmatprep.subr.mxu0 0.0
    %200 = vmatpush1.msra.mxu0 0.0
    %201 = vmatprep.subr.mxu0 0.0
    %202 = vmatpush1.msra.mxu0 %v41
    %203 = vmatprep.subr.mxu0 0.0
    %204 = vmatpush1.msra.mxu0 %v40
    %205 = vmatprep.subr.mxu0 0.0
    %206 = vmatpush1.msra.mxu0 %v39
    %207 = vmatprep.subr.mxu0 0.0
    %208 = vmatpush1.msra.mxu0 %v38
    %209 = vmatprep.subr.mxu0 0.0
    %210 = vmatpush2.msra.mxu0 0.0
    %211 = vmatprep.subr.mxu0 0.0
    %212 = vmatpush2.msra.mxu0 0.0
    %213 = vmatprep.subr.mxu0 0.0
    %214 = vmatpush2.msra.mxu0 0.0
    %215 = vmatprep.subr.mxu0 0.0
    %216 = vmatpush2.msra.mxu0 0.0
    %217 = vmatprep.subr.mxu0 0.0
    %218 = vmatpush2.msra.mxu0 0.0
    %219 = vmatprep.subr.mxu0 0.0
    %220 = vmatpush2.msra.mxu0 0.0
    %221 = vmatprep.subr.mxu0 0.0
    %222 = vmatpush2.msra.mxu0 0.0
    %223 = vmatprep.subr.mxu0 0.0
    %224 = vmatpush2.msra.mxu0 0.0
    %225 = vmatprep.subr.mxu0 0.0
    %226 = vmatpush2.msra.mxu0 0.0
    %227 = vmatprep.subr.mxu0 0.0
    %228 = vmatpush2.msra.mxu0 0.0
    %229 = vmatprep.subr.mxu0 0.0
    %230 = vmatpush2.msra.mxu0 0.0
    %231 = vmatprep.subr.mxu0 0.0
    %232 = vmatpush2.msra.mxu0 0.0
    %233 = vmatprep.subr.mxu0 0.0
    %234 = vmatpush2.msra.mxu0 0.0
    %235 = vmatprep.subr.mxu0 0.0
    %236 = vmatpush2.msra.mxu0 0.0
    %237 = vmatprep.subr.mxu0 0.0
    %238 = vmatpush2.msra.mxu0 0.0
    %239 = vmatprep.subr.mxu0 0.0
    %240 = vmatpush2.msra.mxu0 0.0
    %241 = vmatprep.mubr.f32.mxu0 0.0
    %242 = vmatmul.mubr.f32.gmra.mxu0 %v175
    %v243 = vpop.f32.mrf.mxu0
    %v244 = vadd.f32 0.0, %v243
    %v245 = vpop.f32.mrf.mxu0
    %246 = vdwg.mxu0
    %v247 = vadd.f32 %v171, %v244
    %v248 = vxor.u32 %v247, 2147483648
    %v249 = vmul.f32 %v248, 1.442695
    %v250 = vpow.pop %v249
    %v251 = vadd.f32 %v250, 1.0
    %v252 = vrcp.pop %v251
    %v253 = vmul.f32 1.0, %v252
    %v254 = vtanh.pop %v247
    %v255 = vmul.f32 %v253, %v156
    %257 = vrot.lane.b32.xlu0 %v254, 32
    %v258 = vpop.permute.xlu0 %257
    %v260 = vmul.f32 %v253, %v258
    %262 = vrot.lane.b32.xlu0 %v260, 32
    %v263 = vpop.permute.xlu0 %262
    %v265 = vadd.f32 %v255, %v263
    %v266 = vtanh.pop %v265
    %268 = vrot.lane.b32.xlu0 %v266, 32
    %v269 = vpop.permute.xlu0 %268
    %v271 = vmul.f32 %v253, %v269
    %s272 = scalar_lea.vmem %s0, 4
    %v273 = vld [vmem:[%s272] sm:$0x3]
    %275 = vset.pattern.permute.xlu0 0
    %276 = vperm.xlu0 %275, %v273
    %v277 = vpop.permute.xlu0 %276
    %v279 = vmul.f32 %v277, %v54
    %v280 = vadd.f32 %v279, %v61
    %282 = vrot.lane.b32.xlu0 %v271, 64
    %v283 = vpop.permute.xlu0 %282
    %v284 = vsel %vm64, %v283, 0
    %286 = vmatprep.subr.mxu0 0.0
    %287 = vmatpush1.msra.mxu0 0.0
    %288 = vmatprep.subr.mxu0 0.0
    %289 = vmatpush1.msra.mxu0 0.0
    %290 = vmatprep.subr.mxu0 0.0
    %291 = vmatpush1.msra.mxu0 0.0
    %292 = vmatprep.subr.mxu0 0.0
    %293 = vmatpush1.msra.mxu0 0.0
    %294 = vmatprep.subr.mxu0 0.0
    %295 = vmatpush1.msra.mxu0 0.0
    %296 = vmatprep.subr.mxu0 0.0
    %297 = vmatpush1.msra.mxu0 0.0
    %298 = vmatprep.subr.mxu0 0.0
    %299 = vmatpush1.msra.mxu0 0.0
    %300 = vmatprep.subr.mxu0 0.0
    %301 = vmatpush1.msra.mxu0 0.0
    %302 = vmatprep.subr.mxu0 0.0
    %303 = vmatpush1.msra.mxu0 0.0
    %304 = vmatprep.subr.mxu0 0.0
    %305 = vmatpush1.msra.mxu0 0.0
    %306 = vmatprep.subr.mxu0 0.0
    %307 = vmatpush1.msra.mxu0 0.0
    %308 = vmatprep.subr.mxu0 0.0
    %309 = vmatpush1.msra.mxu0 0.0
    %310 = vmatprep.subr.mxu0 0.0
    %311 = vmatpush1.msra.mxu0 %v41
    %312 = vmatprep.subr.mxu0 0.0
    %313 = vmatpush1.msra.mxu0 %v40
    %314 = vmatprep.subr.mxu0 0.0
    %315 = vmatpush1.msra.mxu0 %v39
    %316 = vmatprep.subr.mxu0 0.0
    %317 = vmatpush1.msra.mxu0 %v38
    %318 = vmatprep.subr.mxu0 0.0
    %319 = vmatpush2.msra.mxu0 0.0
    %320 = vmatprep.subr.mxu0 0.0
    %321 = vmatpush2.msra.mxu0 0.0
    %322 = vmatprep.subr.mxu0 0.0
    %323 = vmatpush2.msra.mxu0 0.0
    %324 = vmatprep.subr.mxu0 0.0
    %325 = vmatpush2.msra.mxu0 0.0
    %326 = vmatprep.subr.mxu0 0.0
    %327 = vmatpush2.msra.mxu0 0.0
    %328 = vmatprep.subr.mxu0 0.0
    %329 = vmatpush2.msra.mxu0 0.0
    %330 = vmatprep.subr.mxu0 0.0
    %331 = vmatpush2.msra.mxu0 0.0
    %332 = vmatprep.subr.mxu0 0.0
    %333 = vmatpush2.msra.mxu0 0.0
    %334 = vmatprep.subr.mxu0 0.0
    %335 = vmatpush2.msra.mxu0 0.0
    %336 = vmatprep.subr.mxu0 0.0
    %337 = vmatpush2.msra.mxu0 0.0
    %338 = vmatprep.subr.mxu0 0.0
    %339 = vmatpush2.msra.mxu0 0.0
    %340 = vmatprep.subr.mxu0 0.0
    %341 = vmatpush2.msra.mxu0 0.0
    %342 = vmatprep.subr.mxu0 0.0
    %343 = vmatpush2.msra.mxu0 0.0
    %344 = vmatprep.subr.mxu0 0.0
    %345 = vmatpush2.msra.mxu0 0.0
    %346 = vmatprep.subr.mxu0 0.0
    %347 = vmatpush2.msra.mxu0 0.0
    %348 = vmatprep.subr.mxu0 0.0
    %349 = vmatpush2.msra.mxu0 0.0
    %350 = vmatprep.mubr.f32.mxu0 0.0
    %351 = vmatmul.mubr.f32.gmra.mxu0 %v284
    %v352 = vpop.f32.mrf.mxu0
    %v353 = vadd.f32 0.0, %v352
    %v354 = vpop.f32.mrf.mxu0
    %355 = vdwg.mxu0
    %v356 = vadd.f32 %v280, %v353
    %v357 = vxor.u32 %v356, 2147483648
    %v358 = vmul.f32 %v357, 1.442695
    %v359 = vpow.pop %v358
    %v360 = vadd.f32 %v359, 1.0
    %v361 = vrcp.pop %v360
    %v362 = vmul.f32 1.0, %v361
    %v363 = vtanh.pop %v356
    %v364 = vmul.f32 %v362, %v265
    %366 = vrot.lane.b32.xlu0 %v363, 32
    %v367 = vpop.permute.xlu0 %366
    %v369 = vmul.f32 %v362, %v367
    %371 = vrot.lane.b32.xlu0 %v369, 32
    %v372 = vpop.permute.xlu0 %371
    %v374 = vadd.f32 %v364, %v372
    %v375 = vtanh.pop %v374
    %377 = vrot.lane.b32.xlu0 %v375, 32
    %v378 = vpop.permute.xlu0 %377
    %v380 = vmul.f32 %v362, %v378
    %s381 = scalar_lea.vmem %s0, 6
    %v382 = vld [vmem:[%s381] sm:$0x3]
    %384 = vset.pattern.permute.xlu0 0
    %385 = vperm.xlu0 %384, %v382
    %v386 = vpop.permute.xlu0 %385
    %v388 = vmul.f32 %v386, %v54
    %v389 = vadd.f32 %v388, %v61
    %391 = vrot.lane.b32.xlu0 %v380, 64
    %v392 = vpop.permute.xlu0 %391
    %v393 = vsel %vm64, %v392, 0
    %395 = vmatprep.subr.mxu0 0.0
    %396 = vmatpush1.msra.mxu0 0.0
    %397 = vmatprep.subr.mxu0 0.0
    %398 = vmatpush1.msra.mxu0 0.0
    %399 = vmatprep.subr.mxu0 0.0
    %400 = vmatpush1.msra.mxu0 0.0
    %401 = vmatprep.subr.mxu0 0.0
    %402 = vmatpush1.msra.mxu0 0.0
    %403 = vmatprep.subr.mxu0 0.0
    %404 = vmatpush1.msra.mxu0 0.0
    %405 = vmatprep.subr.mxu0 0.0
    %406 = vmatpush1.msra.mxu0 0.0
    %407 = vmatprep.subr.mxu0 0.0
    %408 = vmatpush1.msra.mxu0 0.0
    %409 = vmatprep.subr.mxu0 0.0
    %410 = vmatpush1.msra.mxu0 0.0
    %411 = vmatprep.subr.mxu0 0.0
    %412 = vmatpush1.msra.mxu0 0.0
    %413 = vmatprep.subr.mxu0 0.0
    %414 = vmatpush1.msra.mxu0 0.0
    %415 = vmatprep.subr.mxu0 0.0
    %416 = vmatpush1.msra.mxu0 0.0
    %417 = vmatprep.subr.mxu0 0.0
    %418 = vmatpush1.msra.mxu0 0.0
    %419 = vmatprep.subr.mxu0 0.0
    %420 = vmatpush1.msra.mxu0 %v41
    %421 = vmatprep.subr.mxu0 0.0
    %422 = vmatpush1.msra.mxu0 %v40
    %423 = vmatprep.subr.mxu0 0.0
    %424 = vmatpush1.msra.mxu0 %v39
    %425 = vmatprep.subr.mxu0 0.0
    %426 = vmatpush1.msra.mxu0 %v38
    %427 = vmatprep.subr.mxu0 0.0
    %428 = vmatpush2.msra.mxu0 0.0
    %429 = vmatprep.subr.mxu0 0.0
    %430 = vmatpush2.msra.mxu0 0.0
    %431 = vmatprep.subr.mxu0 0.0
    %432 = vmatpush2.msra.mxu0 0.0
    %433 = vmatprep.subr.mxu0 0.0
    %434 = vmatpush2.msra.mxu0 0.0
    %435 = vmatprep.subr.mxu0 0.0
    %436 = vmatpush2.msra.mxu0 0.0
    %437 = vmatprep.subr.mxu0 0.0
    %438 = vmatpush2.msra.mxu0 0.0
    %439 = vmatprep.subr.mxu0 0.0
    %440 = vmatpush2.msra.mxu0 0.0
    %441 = vmatprep.subr.mxu0 0.0
    %442 = vmatpush2.msra.mxu0 0.0
    %443 = vmatprep.subr.mxu0 0.0
    %444 = vmatpush2.msra.mxu0 0.0
    %445 = vmatprep.subr.mxu0 0.0
    %446 = vmatpush2.msra.mxu0 0.0
    %447 = vmatprep.subr.mxu0 0.0
    %448 = vmatpush2.msra.mxu0 0.0
    %449 = vmatprep.subr.mxu0 0.0
    %450 = vmatpush2.msra.mxu0 0.0
    %451 = vmatprep.subr.mxu0 0.0
    %452 = vmatpush2.msra.mxu0 0.0
    %453 = vmatprep.subr.mxu0 0.0
    %454 = vmatpush2.msra.mxu0 0.0
    %455 = vmatprep.subr.mxu0 0.0
    %456 = vmatpush2.msra.mxu0 0.0
    %457 = vmatprep.subr.mxu0 0.0
    %458 = vmatpush2.msra.mxu0 0.0
    %459 = vmatprep.mubr.f32.mxu0 0.0
    %460 = vmatmul.mubr.f32.gmra.mxu0 %v393
    %v461 = vpop.f32.mrf.mxu0
    %v462 = vadd.f32 0.0, %v461
    %v463 = vpop.f32.mrf.mxu0
    %464 = vdwg.mxu0
    %v465 = vadd.f32 %v389, %v462
    %v466 = vxor.u32 %v465, 2147483648
    %v467 = vmul.f32 %v466, 1.442695
    %v468 = vpow.pop %v467
    %v469 = vadd.f32 %v468, 1.0
    %v470 = vrcp.pop %v469
    %v471 = vmul.f32 1.0, %v470
    %v472 = vtanh.pop %v465
    %v473 = vmul.f32 %v471, %v374
    %475 = vrot.lane.b32.xlu0 %v472, 32
    %v476 = vpop.permute.xlu0 %475
    %v478 = vmul.f32 %v471, %v476
    %480 = vrot.lane.b32.xlu0 %v478, 32
    %v481 = vpop.permute.xlu0 %480
    %v483 = vadd.f32 %v473, %v481
    %v484 = vtanh.pop %v483
    %486 = vrot.lane.b32.xlu0 %v484, 32
    %v487 = vpop.permute.xlu0 %486
    %v489 = vmul.f32 %v471, %v487
    %s490 = scalar_lea.vmem %s0, 8
    %v491 = vld [vmem:[%s490] sm:$0x3]
    %493 = vset.pattern.permute.xlu0 0
    %494 = vperm.xlu0 %493, %v491
    %v495 = vpop.permute.xlu0 %494
    %v497 = vmul.f32 %v495, %v54
    %v498 = vadd.f32 %v497, %v61
    %500 = vrot.lane.b32.xlu0 %v489, 64
    %v501 = vpop.permute.xlu0 %500
    %v502 = vsel %vm64, %v501, 0
    %504 = vmatprep.subr.mxu0 0.0
    %505 = vmatpush1.msra.mxu0 0.0
    %506 = vmatprep.subr.mxu0 0.0
    %507 = vmatpush1.msra.mxu0 0.0
    %508 = vmatprep.subr.mxu0 0.0
    %509 = vmatpush1.msra.mxu0 0.0
    %510 = vmatprep.subr.mxu0 0.0
    %511 = vmatpush1.msra.mxu0 0.0
    %512 = vmatprep.subr.mxu0 0.0
    %513 = vmatpush1.msra.mxu0 0.0
    %514 = vmatprep.subr.mxu0 0.0
    %515 = vmatpush1.msra.mxu0 0.0
    %516 = vmatprep.subr.mxu0 0.0
    %517 = vmatpush1.msra.mxu0 0.0
    %518 = vmatprep.subr.mxu0 0.0
    %519 = vmatpush1.msra.mxu0 0.0
    %520 = vmatprep.subr.mxu0 0.0
    %521 = vmatpush1.msra.mxu0 0.0
    %522 = vmatprep.subr.mxu0 0.0
    %523 = vmatpush1.msra.mxu0 0.0
    %524 = vmatprep.subr.mxu0 0.0
    %525 = vmatpush1.msra.mxu0 0.0
    %526 = vmatprep.subr.mxu0 0.0
    %527 = vmatpush1.msra.mxu0 0.0
    %528 = vmatprep.subr.mxu0 0.0
    %529 = vmatpush1.msra.mxu0 %v41
    %530 = vmatprep.subr.mxu0 0.0
    %531 = vmatpush1.msra.mxu0 %v40
    %532 = vmatprep.subr.mxu0 0.0
    %533 = vmatpush1.msra.mxu0 %v39
    %534 = vmatprep.subr.mxu0 0.0
    %535 = vmatpush1.msra.mxu0 %v38
    %536 = vmatprep.subr.mxu0 0.0
    %537 = vmatpush2.msra.mxu0 0.0
    %538 = vmatprep.subr.mxu0 0.0
    %539 = vmatpush2.msra.mxu0 0.0
    %540 = vmatprep.subr.mxu0 0.0
    %541 = vmatpush2.msra.mxu0 0.0
    %542 = vmatprep.subr.mxu0 0.0
    %543 = vmatpush2.msra.mxu0 0.0
    %544 = vmatprep.subr.mxu0 0.0
    %545 = vmatpush2.msra.mxu0 0.0
    %546 = vmatprep.subr.mxu0 0.0
    %547 = vmatpush2.msra.mxu0 0.0
    %548 = vmatprep.subr.mxu0 0.0
    %549 = vmatpush2.msra.mxu0 0.0
    %550 = vmatprep.subr.mxu0 0.0
    %551 = vmatpush2.msra.mxu0 0.0
    %552 = vmatprep.subr.mxu0 0.0
    %553 = vmatpush2.msra.mxu0 0.0
    %554 = vmatprep.subr.mxu0 0.0
    %555 = vmatpush2.msra.mxu0 0.0
    %556 = vmatprep.subr.mxu0 0.0
    %557 = vmatpush2.msra.mxu0 0.0
    %558 = vmatprep.subr.mxu0 0.0
    %559 = vmatpush2.msra.mxu0 0.0
    %560 = vmatprep.subr.mxu0 0.0
    %561 = vmatpush2.msra.mxu0 0.0
    %562 = vmatprep.subr.mxu0 0.0
    %563 = vmatpush2.msra.mxu0 0.0
    %564 = vmatprep.subr.mxu0 0.0
    %565 = vmatpush2.msra.mxu0 0.0
    %566 = vmatprep.subr.mxu0 0.0
    %567 = vmatpush2.msra.mxu0 0.0
    %568 = vmatprep.mubr.f32.mxu0 0.0
    %569 = vmatmul.mubr.f32.gmra.mxu0 %v502
    %v570 = vpop.f32.mrf.mxu0
    %v571 = vadd.f32 0.0, %v570
    %v572 = vpop.f32.mrf.mxu0
    %573 = vdwg.mxu0
    %v574 = vadd.f32 %v498, %v571
    %v575 = vxor.u32 %v574, 2147483648
    %v576 = vmul.f32 %v575, 1.442695
    %v577 = vpow.pop %v576
    %v578 = vadd.f32 %v577, 1.0
    %v579 = vrcp.pop %v578
    %v580 = vmul.f32 1.0, %v579
    %v581 = vtanh.pop %v574
    %v582 = vmul.f32 %v580, %v483
    %584 = vrot.lane.b32.xlu0 %v581, 32
    %v585 = vpop.permute.xlu0 %584
    %v587 = vmul.f32 %v580, %v585
    %589 = vrot.lane.b32.xlu0 %v587, 32
    %v590 = vpop.permute.xlu0 %589
    %v592 = vadd.f32 %v582, %v590
    %v593 = vtanh.pop %v592
    %595 = vrot.lane.b32.xlu0 %v593, 32
    %v596 = vpop.permute.xlu0 %595
    %v598 = vmul.f32 %v580, %v596
    %s599 = scalar_lea.vmem %s0, 10
    %v600 = vld [vmem:[%s599] sm:$0x3]
    %602 = vset.pattern.permute.xlu0 0
    %603 = vperm.xlu0 %602, %v600
    %v604 = vpop.permute.xlu0 %603
    %v606 = vmul.f32 %v604, %v54
    %v607 = vadd.f32 %v606, %v61
    %609 = vrot.lane.b32.xlu0 %v598, 64
    %v610 = vpop.permute.xlu0 %609
    %v611 = vsel %vm64, %v610, 0
    %613 = vmatprep.subr.mxu0 0.0
    %614 = vmatpush1.msra.mxu0 0.0
    %615 = vmatprep.subr.mxu0 0.0
    %616 = vmatpush1.msra.mxu0 0.0
    %617 = vmatprep.subr.mxu0 0.0
    %618 = vmatpush1.msra.mxu0 0.0
    %619 = vmatprep.subr.mxu0 0.0
    %620 = vmatpush1.msra.mxu0 0.0
    %621 = vmatprep.subr.mxu0 0.0
    %622 = vmatpush1.msra.mxu0 0.0
    %623 = vmatprep.subr.mxu0 0.0
    %624 = vmatpush1.msra.mxu0 0.0
    %625 = vmatprep.subr.mxu0 0.0
    %626 = vmatpush1.msra.mxu0 0.0
    %627 = vmatprep.subr.mxu0 0.0
    %628 = vmatpush1.msra.mxu0 0.0
    %629 = vmatprep.subr.mxu0 0.0
    %630 = vmatpush1.msra.mxu0 0.0
    %631 = vmatprep.subr.mxu0 0.0
    %632 = vmatpush1.msra.mxu0 0.0
    %633 = vmatprep.subr.mxu0 0.0
    %634 = vmatpush1.msra.mxu0 0.0
    %635 = vmatprep.subr.mxu0 0.0
    %636 = vmatpush1.msra.mxu0 0.0
    %637 = vmatprep.subr.mxu0 0.0
    %638 = vmatpush1.msra.mxu0 %v41
    %639 = vmatprep.subr.mxu0 0.0
    %640 = vmatpush1.msra.mxu0 %v40
    %641 = vmatprep.subr.mxu0 0.0
    %642 = vmatpush1.msra.mxu0 %v39
    %643 = vmatprep.subr.mxu0 0.0
    %644 = vmatpush1.msra.mxu0 %v38
    %645 = vmatprep.subr.mxu0 0.0
    %646 = vmatpush2.msra.mxu0 0.0
    %647 = vmatprep.subr.mxu0 0.0
    %648 = vmatpush2.msra.mxu0 0.0
    %649 = vmatprep.subr.mxu0 0.0
    %650 = vmatpush2.msra.mxu0 0.0
    %651 = vmatprep.subr.mxu0 0.0
    %652 = vmatpush2.msra.mxu0 0.0
    %653 = vmatprep.subr.mxu0 0.0
    %654 = vmatpush2.msra.mxu0 0.0
    %655 = vmatprep.subr.mxu0 0.0
    %656 = vmatpush2.msra.mxu0 0.0
    %657 = vmatprep.subr.mxu0 0.0
    %658 = vmatpush2.msra.mxu0 0.0
    %659 = vmatprep.subr.mxu0 0.0
    %660 = vmatpush2.msra.mxu0 0.0
    %661 = vmatprep.subr.mxu0 0.0
    %662 = vmatpush2.msra.mxu0 0.0
    %663 = vmatprep.subr.mxu0 0.0
    %664 = vmatpush2.msra.mxu0 0.0
    %665 = vmatprep.subr.mxu0 0.0
    %666 = vmatpush2.msra.mxu0 0.0
    %667 = vmatprep.subr.mxu0 0.0
    %668 = vmatpush2.msra.mxu0 0.0
    %669 = vmatprep.subr.mxu0 0.0
    %670 = vmatpush2.msra.mxu0 0.0
    %671 = vmatprep.subr.mxu0 0.0
    %672 = vmatpush2.msra.mxu0 0.0
    %673 = vmatprep.subr.mxu0 0.0
    %674 = vmatpush2.msra.mxu0 0.0
    %675 = vmatprep.subr.mxu0 0.0
    %676 = vmatpush2.msra.mxu0 0.0
    %677 = vmatprep.mubr.f32.mxu0 0.0
    %678 = vmatmul.mubr.f32.gmra.mxu0 %v611
    %v679 = vpop.f32.mrf.mxu0
    %v680 = vadd.f32 0.0, %v679
    %v681 = vpop.f32.mrf.mxu0
    %682 = vdwg.mxu0
    %v683 = vadd.f32 %v607, %v680
    %v684 = vxor.u32 %v683, 2147483648
    %v685 = vmul.f32 %v684, 1.442695
    %v686 = vpow.pop %v685
    %v687 = vadd.f32 %v686, 1.0
    %v688 = vrcp.pop %v687
    %v689 = vmul.f32 1.0, %v688
    %v690 = vtanh.pop %v683
    %v691 = vmul.f32 %v689, %v592
    %693 = vrot.lane.b32.xlu0 %v690, 32
    %v694 = vpop.permute.xlu0 %693
    %v696 = vmul.f32 %v689, %v694
    %698 = vrot.lane.b32.xlu0 %v696, 32
    %v699 = vpop.permute.xlu0 %698
    %v701 = vadd.f32 %v691, %v699
    %v702 = vtanh.pop %v701
    %704 = vrot.lane.b32.xlu0 %v702, 32
    %v705 = vpop.permute.xlu0 %704
    %v707 = vmul.f32 %v689, %v705
    %s708 = scalar_lea.vmem %s0, 12
    %v709 = vld [vmem:[%s708] sm:$0x3]
    %711 = vset.pattern.permute.xlu0 0
    %712 = vperm.xlu0 %711, %v709
    %v713 = vpop.permute.xlu0 %712
    %v715 = vmul.f32 %v713, %v54
    %v716 = vadd.f32 %v715, %v61
    %718 = vrot.lane.b32.xlu0 %v707, 64
    %v719 = vpop.permute.xlu0 %718
    %v720 = vsel %vm64, %v719, 0
    %722 = vmatprep.subr.mxu0 0.0
    %723 = vmatpush1.msra.mxu0 0.0
    %724 = vmatprep.subr.mxu0 0.0
    %725 = vmatpush1.msra.mxu0 0.0
    %726 = vmatprep.subr.mxu0 0.0
    %727 = vmatpush1.msra.mxu0 0.0
    %728 = vmatprep.subr.mxu0 0.0
    %729 = vmatpush1.msra.mxu0 0.0
    %730 = vmatprep.subr.mxu0 0.0
    %731 = vmatpush1.msra.mxu0 0.0
    %732 = vmatprep.subr.mxu0 0.0
    %733 = vmatpush1.msra.mxu0 0.0
    %734 = vmatprep.subr.mxu0 0.0
    %735 = vmatpush1.msra.mxu0 0.0
    %736 = vmatprep.subr.mxu0 0.0
    %737 = vmatpush1.msra.mxu0 0.0
    %738 = vmatprep.subr.mxu0 0.0
    %739 = vmatpush1.msra.mxu0 0.0
    %740 = vmatprep.subr.mxu0 0.0
    %741 = vmatpush1.msra.mxu0 0.0
    %742 = vmatprep.subr.mxu0 0.0
    %743 = vmatpush1.msra.mxu0 0.0
    %744 = vmatprep.subr.mxu0 0.0
    %745 = vmatpush1.msra.mxu0 0.0
    %746 = vmatprep.subr.mxu0 0.0
    %747 = vmatpush1.msra.mxu0 %v41
    %748 = vmatprep.subr.mxu0 0.0
    %749 = vmatpush1.msra.mxu0 %v40
    %750 = vmatprep.subr.mxu0 0.0
    %751 = vmatpush1.msra.mxu0 %v39
    %752 = vmatprep.subr.mxu0 0.0
    %753 = vmatpush1.msra.mxu0 %v38
    %754 = vmatprep.subr.mxu0 0.0
    %755 = vmatpush2.msra.mxu0 0.0
    %756 = vmatprep.subr.mxu0 0.0
    %757 = vmatpush2.msra.mxu0 0.0
    %758 = vmatprep.subr.mxu0 0.0
    %759 = vmatpush2.msra.mxu0 0.0
    %760 = vmatprep.subr.mxu0 0.0
    %761 = vmatpush2.msra.mxu0 0.0
    %762 = vmatprep.subr.mxu0 0.0
    %763 = vmatpush2.msra.mxu0 0.0
    %764 = vmatprep.subr.mxu0 0.0
    %765 = vmatpush2.msra.mxu0 0.0
    %766 = vmatprep.subr.mxu0 0.0
    %767 = vmatpush2.msra.mxu0 0.0
    %768 = vmatprep.subr.mxu0 0.0
    %769 = vmatpush2.msra.mxu0 0.0
    %770 = vmatprep.subr.mxu0 0.0
    %771 = vmatpush2.msra.mxu0 0.0
    %772 = vmatprep.subr.mxu0 0.0
    %773 = vmatpush2.msra.mxu0 0.0
    %774 = vmatprep.subr.mxu0 0.0
    %775 = vmatpush2.msra.mxu0 0.0
    %776 = vmatprep.subr.mxu0 0.0
    %777 = vmatpush2.msra.mxu0 0.0
    %778 = vmatprep.subr.mxu0 0.0
    %779 = vmatpush2.msra.mxu0 0.0
    %780 = vmatprep.subr.mxu0 0.0
    %781 = vmatpush2.msra.mxu0 0.0
    %782 = vmatprep.subr.mxu0 0.0
    %783 = vmatpush2.msra.mxu0 0.0
    %784 = vmatprep.subr.mxu0 0.0
    %785 = vmatpush2.msra.mxu0 0.0
    %786 = vmatprep.mubr.f32.mxu0 0.0
    %787 = vmatmul.mubr.f32.gmra.mxu0 %v720
    %v788 = vpop.f32.mrf.mxu0
    %v789 = vadd.f32 0.0, %v788
    %v790 = vpop.f32.mrf.mxu0
    %791 = vdwg.mxu0
    %v792 = vadd.f32 %v716, %v789
    %v793 = vxor.u32 %v792, 2147483648
    %v794 = vmul.f32 %v793, 1.442695
    %v795 = vpow.pop %v794
    %v796 = vadd.f32 %v795, 1.0
    %v797 = vrcp.pop %v796
    %v798 = vmul.f32 1.0, %v797
    %v799 = vtanh.pop %v792
    %v800 = vmul.f32 %v798, %v701
    %802 = vrot.lane.b32.xlu0 %v799, 32
    %v803 = vpop.permute.xlu0 %802
    %v805 = vmul.f32 %v798, %v803
    %807 = vrot.lane.b32.xlu0 %v805, 32
    %v808 = vpop.permute.xlu0 %807
    %v810 = vadd.f32 %v800, %v808
    %v811 = vtanh.pop %v810
    %813 = vrot.lane.b32.xlu0 %v811, 32
    %v814 = vpop.permute.xlu0 %813
    %v816 = vmul.f32 %v798, %v814
    %s817 = scalar_lea.vmem %s0, 14
    %v818 = vld [vmem:[%s817] sm:$0x3]
    %820 = vset.pattern.permute.xlu0 0
    %821 = vperm.xlu0 %820, %v818
    %v822 = vpop.permute.xlu0 %821
    %v824 = vmul.f32 %v822, %v54
    %v825 = vadd.f32 %v824, %v61
    %827 = vrot.lane.b32.xlu0 %v816, 64
    %v828 = vpop.permute.xlu0 %827
    %v829 = vsel %vm64, %v828, 0
    %831 = vmatprep.subr.mxu0 0.0
    %832 = vmatpush1.msra.mxu0 0.0
    %833 = vmatprep.subr.mxu0 0.0
    %834 = vmatpush1.msra.mxu0 0.0
    %835 = vmatprep.subr.mxu0 0.0
    %836 = vmatpush1.msra.mxu0 0.0
    %837 = vmatprep.subr.mxu0 0.0
    %838 = vmatpush1.msra.mxu0 0.0
    %839 = vmatprep.subr.mxu0 0.0
    %840 = vmatpush1.msra.mxu0 0.0
    %841 = vmatprep.subr.mxu0 0.0
    %842 = vmatpush1.msra.mxu0 0.0
    %843 = vmatprep.subr.mxu0 0.0
    %844 = vmatpush1.msra.mxu0 0.0
    %845 = vmatprep.subr.mxu0 0.0
    %846 = vmatpush1.msra.mxu0 0.0
    %847 = vmatprep.subr.mxu0 0.0
    %848 = vmatpush1.msra.mxu0 0.0
    %849 = vmatprep.subr.mxu0 0.0
    %850 = vmatpush1.msra.mxu0 0.0
    %851 = vmatprep.subr.mxu0 0.0
    %852 = vmatpush1.msra.mxu0 0.0
    %853 = vmatprep.subr.mxu0 0.0
    %854 = vmatpush1.msra.mxu0 0.0
    %855 = vmatprep.subr.mxu0 0.0
    %856 = vmatpush1.msra.mxu0 %v41
    %857 = vmatprep.subr.mxu0 0.0
    %858 = vmatpush1.msra.mxu0 %v40
    %859 = vmatprep.subr.mxu0 0.0
    %860 = vmatpush1.msra.mxu0 %v39
    %861 = vmatprep.subr.mxu0 0.0
    %862 = vmatpush1.msra.mxu0 %v38
    %863 = vmatprep.subr.mxu0 0.0
    %864 = vmatpush2.msra.mxu0 0.0
    %865 = vmatprep.subr.mxu0 0.0
    %866 = vmatpush2.msra.mxu0 0.0
    %867 = vmatprep.subr.mxu0 0.0
    %868 = vmatpush2.msra.mxu0 0.0
    %869 = vmatprep.subr.mxu0 0.0
    %870 = vmatpush2.msra.mxu0 0.0
    %871 = vmatprep.subr.mxu0 0.0
    %872 = vmatpush2.msra.mxu0 0.0
    %873 = vmatprep.subr.mxu0 0.0
    %874 = vmatpush2.msra.mxu0 0.0
    %875 = vmatprep.subr.mxu0 0.0
    %876 = vmatpush2.msra.mxu0 0.0
    %877 = vmatprep.subr.mxu0 0.0
    %878 = vmatpush2.msra.mxu0 0.0
    %879 = vmatprep.subr.mxu0 0.0
    %880 = vmatpush2.msra.mxu0 0.0
    %881 = vmatprep.subr.mxu0 0.0
    %882 = vmatpush2.msra.mxu0 0.0
    %883 = vmatprep.subr.mxu0 0.0
    %884 = vmatpush2.msra.mxu0 0.0
    %885 = vmatprep.subr.mxu0 0.0
    %886 = vmatpush2.msra.mxu0 0.0
    %887 = vmatprep.subr.mxu0 0.0
    %888 = vmatpush2.msra.mxu0 0.0
    %889 = vmatprep.subr.mxu0 0.0
    %890 = vmatpush2.msra.mxu0 0.0
    %891 = vmatprep.subr.mxu0 0.0
    %892 = vmatpush2.msra.mxu0 0.0
    %893 = vmatprep.subr.mxu0 0.0
    %894 = vmatpush2.msra.mxu0 0.0
    %895 = vmatprep.mubr.f32.mxu0 0.0
    %896 = vmatmul.mubr.f32.gmra.mxu0 %v829
    %v897 = vpop.f32.mrf.mxu0
    %v898 = vadd.f32 0.0, %v897
    %v899 = vpop.f32.mrf.mxu0
    %900 = vdwg.mxu0
    %v901 = vadd.f32 %v825, %v898
    %v902 = vxor.u32 %v901, 2147483648
    %v903 = vmul.f32 %v902, 1.442695
    %v904 = vpow.pop %v903
    %v905 = vadd.f32 %v904, 1.0
    %v906 = vrcp.pop %v905
    %v907 = vmul.f32 1.0, %v906
    %v908 = vtanh.pop %v901
    %v909 = vmul.f32 %v907, %v810
    %911 = vrot.lane.b32.xlu0 %v908, 32
    %v912 = vpop.permute.xlu0 %911
    %v914 = vmul.f32 %v907, %v912
    %916 = vrot.lane.b32.xlu0 %v914, 32
    %v917 = vpop.permute.xlu0 %916
    %v919 = vadd.f32 %v909, %v917
    %v920 = vtanh.pop %v919
    %922 = vrot.lane.b32.xlu0 %v920, 32
    %v923 = vpop.permute.xlu0 %922
    %v925 = vmul.f32 %v907, %v923
    %v926 = vld [vmem:[%s4] sm:$0x1]
    %v928 = vlaneseq
    %v929 = vshrl.u32 %v928, 7
    %v930 = vsub.s32 0, %v929
    %v931 = vrot.slane %v926, %v930
    %932 = vrot.lane.b32.xlu0 %v931, 64
    %v933 = vpop.permute.xlu0 %932
    %v935 = vmul.f32 %v925, %v933
    %937 = vrot.lane.b32.xlu0 %v935, 64
    %v938 = vpop.permute.xlu0 %937
    %vm940 = vcmask 254976
    %v941 = vsel %vm940, %v938, 0.0
    %942 = vadd.xlane.f32.xlu0 %v941
    %v943 = vpop.xlane.xlu0 %942
    %s944 = sld [smem:[#allocation2]]
    %v945 = vstv %s944
    %v946 = vadd.f32 %v943, %v945
    %vm947 = vcmask 1024
    %948 = vst.msk [vmem:[%s6] sm:$0x3] %vm947, %v946
    // Predicated region
    $region30: #{lstm_forward.1} parent=1 // pred_check
      _
    $region31: #{lstm_forward.1} parent=1 // pred_check_branch
      %950 = sbr.rel (0) target = $region33
    $region32: #{lstm_forward.1} parent=1 // pred_region
      _
    $region33: #{lstm_forward.1} parent=1 // pred_fallthru
      _
    // Predicated region
    $region34: #{lstm_forward.1} parent=1 // pred_check
      _
    $region35: #{lstm_forward.1} parent=1 // pred_check_branch
      %952 = sbr.rel (0) target = $region37
    $region36: #{lstm_forward.1} parent=1 // pred_region
      _
    $region37: #{lstm_forward.1} parent=1 // pred_fallthru
      _
    %953 = vsyncpa [#allocation4], 1

</llo_original>
